<compile_context>
chip_gen: v7x
topology: tpu7x:2x2x1
jax: 0.10.0
libtpu: 0.0.40
codegen_flags: <defaults>
</compile_context>

<pallas_src>
import jax
import jax.numpy as jnp
from jax.experimental import pallas as pl
from jax.experimental.pallas import tpu as pltpu

EPS = 1e-6


def _layernorm_kernel(alpha_ref, bias_ref, x_ref, o_ref):
    # alpha_ref, bias_ref: (1,) scalars in SMEM
    # x_ref, o_ref: (row_tile, hidden) tiles in VMEM
    x = x_ref[...].astype(jnp.float32)
    n = x.shape[-1]

    # One pass: sum(x) and sum(x*x) together.
    s1 = jnp.sum(x, axis=-1, keepdims=True)          # (rows, 1)
    s2 = jnp.sum(x * x, axis=-1, keepdims=True)      # (rows, 1)
    mean = s1 * jnp.float32(1.0 / n)
    # Unbiased variance (Bessel's correction), like torch.Tensor.std default.
    # sum((x-mean)^2) == s2 - mean*s1.  (n == 1 yields nan, matching torch.)
    var = (s2 - mean * s1) / jnp.float32(n - 1)
    std = jnp.sqrt(var)

    denom = std + jnp.float32(EPS)
    # EUP approximate reciprocal + one Newton-Raphson step -> ~f32 accuracy,
    # keeps the divide off the per-element VPU path.
    inv = pl.reciprocal(denom, approx=True)
    inv = inv * (jnp.float32(2.0) - denom * inv)

    alpha = alpha_ref[0]
    bias = bias_ref[0]
    scale = alpha * inv                 # (rows, 1)
    shift = bias - scale * mean         # (rows, 1)

    # Single fused multiply-add per element.
    o_ref[...] = (x * scale + shift).astype(o_ref.dtype)


def layer_normalization(
    x,
    alpha,
    bias,
    *,
    target_tile_bytes=2 * 1024 * 1024,
    vmem_limit_bytes=32 * 1024 * 1024,
):
    """LayerNormalization(x) with scalar alpha/bias, normalized over last axis."""
    orig_shape = x.shape
    hidden = orig_shape[-1]
    rows = 1
    for d in orig_shape[:-1]:
        rows *= d
    x2 = x.reshape(rows, hidden)

    itemsize = jnp.dtype(x.dtype).itemsize
    row_bytes = max(hidden * itemsize, 1)
    # Sublane granularity: 8 rows for 4-byte dtypes, 16 for bf16, 32 for 1-byte.
    row_align = max(8, 32 // itemsize)

    # Largest aligned row tile that fits the per-tile byte budget.
    row_tile = (target_tile_bytes // row_bytes) // row_align * row_align
    row_tile = max(row_align, row_tile)
    if row_tile >= rows:
        row_tile = rows  # single block == full array dims (always legal)
    grid = (pl.cdiv(rows, row_tile),)

    # Make sure double-buffered in+out tiles fit the scoped VMEM limit.
    vmem_limit = int(max(vmem_limit_bytes, 4 * row_tile * row_bytes + (4 << 20)))

    alpha = jnp.asarray(alpha, dtype=jnp.float32).reshape((1,))
    bias = jnp.asarray(bias, dtype=jnp.float32).reshape((1,))

    out = pl.pallas_call(
        _layernorm_kernel,
        out_shape=jax.ShapeDtypeStruct((rows, hidden), x.dtype),
        grid_spec=pltpu.PrefetchScalarGridSpec(
            num_scalar_prefetch=0,
            grid=grid,
            in_specs=[
                pl.BlockSpec(memory_space=pltpu.MemorySpace.SMEM),   # alpha
                pl.BlockSpec(memory_space=pltpu.MemorySpace.SMEM),   # bias
                pl.BlockSpec((row_tile, hidden), lambda i: (i, 0)),  # x
            ],
            out_specs=pl.BlockSpec((row_tile, hidden), lambda i: (i, 0)),
        ),
        compiler_params=pltpu.CompilerParams(
            dimension_semantics=("parallel",),
            vmem_limit_bytes=vmem_limit,
        ),
    )(alpha, bias, x2)

    return out.reshape(orig_shape)


def _reference(x, alpha, bias):
    # Pure-JAX reference mirroring the PyTorch forward exactly.
    x = x.astype(jnp.float32)
    mean = jnp.mean(x, axis=-1, keepdims=True)
    var = jnp.sum((x - mean) ** 2, axis=-1, keepdims=True) / (x.shape[-1] - 1)
    std = jnp.sqrt(var)
    return alpha * (x - mean) / (std + EPS) + bias


if __name__ == "__main__":
    key = jax.random.PRNGKey(0)
    batch, seq, hidden = 2, 8, 32
    x = jax.random.normal(key, (batch, seq, hidden), dtype=jnp.float32)

    # Deterministic parameter init, matching nn.Parameter(torch.ones(1)/zeros(1))
    alpha = jnp.ones((1,), dtype=jnp.float32)
    bias = jnp.zeros((1,), dtype=jnp.float32)

    out = layer_normalization(x, alpha, bias)
    out = jax.block_until_ready(out)

    ref = _reference(x, alpha, bias)
    assert out.shape == x.shape
    assert jnp.allclose(out, ref, atol=1e-5, rtol=1e-5), "mismatch vs reference"

    print("KERNEL_OK")
</pallas_src>

<mosaic_0001>
module attributes {stable_mosaic.version = 11 : i64} {
  func.func @_layernorm_kernel(%arg0: i32, %arg1: memref<1xf32, #tpu.memory_space<smem>>, %arg2: memref<1xf32, #tpu.memory_space<smem>>, %arg3: memref<16x32xf32, #tpu.memory_space<vmem>>, %arg4: memref<16x32xf32, #tpu.memory_space<vmem>>) attributes {dimension_semantics = [#tpu.dimension_semantics<parallel>], iteration_bounds = array<i64: 1>, scalar_prefetch = 0 : i64, scratch_operands = 0 : i64, tpu.core_type = #tpu.core_type<tc>, window_params = [{transform_indices = @transform_0, window_bounds = array<i64: 1>}, {transform_indices = @transform_1, window_bounds = array<i64: 1>}, {transform_indices = @transform_2, window_bounds = array<i64: 16, 32>}, {transform_indices = @transform_3, window_bounds = array<i64: 16, 32>}]} {
    %c0 = arith.constant 0 : index
    %c0_0 = arith.constant 0 : index
    %0 = vector.load %arg3[%c0, %c0_0] : memref<16x32xf32, #tpu.memory_space<vmem>>, vector<16x32xf32>
    %cst = arith.constant dense<0.000000e+00> : vector<16xf32>
    %1 = vector.multi_reduction <add>, %0, %cst [1] : vector<16x32xf32> to vector<16xf32>
    %2 = vector.shape_cast %1 : vector<16xf32> to vector<16x1xf32>
    %3 = arith.mulf %0, %0 : vector<16x32xf32>
    %cst_1 = arith.constant dense<0.000000e+00> : vector<16xf32>
    %4 = vector.multi_reduction <add>, %3, %cst_1 [1] : vector<16x32xf32> to vector<16xf32>
    %5 = vector.shape_cast %4 : vector<16xf32> to vector<16x1xf32>
    %cst_2 = arith.constant 3.125000e-02 : f32
    %6 = vector.broadcast %cst_2 : f32 to vector<16x1xf32>
    %7 = arith.mulf %2, %6 : vector<16x1xf32>
    %8 = arith.mulf %7, %2 : vector<16x1xf32>
    %9 = arith.subf %5, %8 : vector<16x1xf32>
    %cst_3 = arith.constant 3.100000e+01 : f32
    %10 = vector.broadcast %cst_3 : f32 to vector<16x1xf32>
    %11 = arith.divf %9, %10 : vector<16x1xf32>
    %12 = math.sqrt %11 : vector<16x1xf32>
    %cst_4 = arith.constant 9.99999997E-7 : f32
    %13 = vector.broadcast %cst_4 : f32 to vector<16x1xf32>
    %14 = arith.addf %12, %13 : vector<16x1xf32>
    %15 = tpu.reciprocal %14 {approx = true} : vector<16x1xf32> -> vector<16x1xf32>
    %16 = arith.mulf %14, %15 : vector<16x1xf32>
    %cst_5 = arith.constant 2.000000e+00 : f32
    %17 = vector.broadcast %cst_5 : f32 to vector<16x1xf32>
    %18 = arith.subf %17, %16 : vector<16x1xf32>
    %19 = arith.mulf %15, %18 : vector<16x1xf32>
    %c0_6 = arith.constant 0 : index
    %20 = memref.load %arg1[%c0_6] : memref<1xf32, #tpu.memory_space<smem>>
    %c0_7 = arith.constant 0 : index
    %21 = memref.load %arg2[%c0_7] : memref<1xf32, #tpu.memory_space<smem>>
    %22 = vector.broadcast %20 : f32 to vector<16x1xf32>
    %23 = arith.mulf %22, %19 : vector<16x1xf32>
    %24 = arith.mulf %23, %7 : vector<16x1xf32>
    %25 = vector.broadcast %21 : f32 to vector<16x1xf32>
    %26 = arith.subf %25, %24 : vector<16x1xf32>
    %27 = vector.broadcast %23 : vector<16x1xf32> to vector<16x32xf32>
    %28 = arith.mulf %0, %27 : vector<16x32xf32>
    %29 = vector.broadcast %26 : vector<16x1xf32> to vector<16x32xf32>
    %30 = arith.addf %28, %29 : vector<16x32xf32>
    %c0_8 = arith.constant 0 : index
    %c0_9 = arith.constant 0 : index
    %31 = vector.load %arg4[%c0_8, %c0_9] : memref<16x32xf32, #tpu.memory_space<vmem>>, vector<16x32xf32>
    tpu.vector_store %arg4[%c0_8, %c0_9], %30 {strides = array<i32>} : memref<16x32xf32, #tpu.memory_space<vmem>>, vector<16x32xf32>,
    return
  }
  func.func @transform_0(%arg0: i32) -> i32 {
    %c0_i32 = arith.constant 0 : i32
    %c0_i32_0 = arith.constant 0 : i32
    return %c0_i32 : i32
  }
  func.func @transform_1(%arg0: i32) -> i32 {
    %c0_i32 = arith.constant 0 : i32
    %c0_i32_0 = arith.constant 0 : i32
    return %c0_i32 : i32
  }
  func.func @transform_2(%arg0: i32) -> (i32, i32) {
    %c0_i32 = arith.constant 0 : i32
    %c0_i32_0 = arith.constant 0 : i32
    return %arg0, %c0_i32 : i32, i32
  }
  func.func @transform_3(%arg0: i32) -> (i32, i32) {
    %c0_i32 = arith.constant 0 : i32
    %c0_i32_0 = arith.constant 0 : i32
    return %arg0, %c0_i32 : i32, i32
  }
}

</mosaic_0001>

<llo_original>
// kernel: tpu_custom_call.1
$region0: #{tpu_custom_call.1}
  #allocation0 [shape = 'u32[]', space=smem, size = 0x4, offset = 0x4, fixed_abs, tag = 'smem constant byte address 0x4 - core index']
  #allocation1 [shape = 'u32[144,128]{1,0:T(1,128)}', space=vmem, size = 0x12000, scoped, tag = 'internal scratch']
  #allocation2 [shape = 'f32[1]{0:T(128)S(6)}', space=smem, size = 0x200, scoped, tag = 'scoped memory for tpu_custom_call.1']
  #allocation3 [shape = 'f32[1]{0:T(128)S(6)}', space=smem, size = 0x200, scoped, tag = 'scoped memory for tpu_custom_call.1']
  %s0 = inlined_call_operand.<no memory space> [shape: f32[1], index: 0, kind: input, shape index: {}]
  %s1 = inlined_call_operand.<no memory space> [shape: f32[1], index: 1, kind: input, shape index: {}]
  %s2 = inlined_call_operand.hbm [shape: f32[16,32], index: 2, kind: input, shape index: {}]
  %s3 = inlined_call_operand.hbm [shape: f32[16,32], index: 3, kind: output, shape index: {}]
  %s4 = sld [smem:[#allocation0]]
  $region26: #{tpu_custom_call.1} parent=0
    _
  %s6 = ssub.s32 1, %s4
  %s7 = scalar_select 0, %s6, %s4
  %8 = sst [smem:[#allocation2]] %s0
  %9 = sst [smem:[#allocation3]] %s1
  $region1: #{tpu_custom_call.1} parent=0
    #allocation4 [shape = 'u8[8192]{0}', space=vmem, size = 0x2000, scoped, tag = 'input window, operand 2, single buffered']
    #allocation5 [shape = 's32[1]{0}', space=sflag, size = 0x4, scoped, tag = 'scoped memory for tpu_custom_call.1']
    #allocation6 [shape = 's32[1]{0}', space=sflag, size = 0x4, scoped, tag = 'scoped memory for tpu_custom_call.1']
    #allocation7 [shape = 'u8[8192]{0}', space=vmem, size = 0x2000, scoped, tag = 'output window, operand 0, single buffered']
    %10 = vsyncpa [#allocation5], 0
    %11 = vsyncpa [#allocation6], 0
    // Predicated region
    $region2: #{tpu_custom_call.1} parent=1 // pred_check
      _
    $region3: #{tpu_custom_call.1} parent=1 // pred_check_branch
      %13 = sbr.rel (0) target = $region5
    $region4: #{tpu_custom_call.1} parent=1 // pred_region
      _
    $region5: #{tpu_custom_call.1} parent=1 // pred_fallthru
      _
    // Predicated region
    $region6: #{tpu_custom_call.1} parent=1 // pred_check
      _
    $region7: #{tpu_custom_call.1} parent=1 // pred_check_branch
      %15 = sbr.rel (0) target = $region9
    $region8: #{tpu_custom_call.1} parent=1 // pred_region
      _
    $region9: #{tpu_custom_call.1} parent=1 // pred_fallthru
      _
    // Predicated region
    $region10: #{tpu_custom_call.1} parent=1 // pred_check
      _
    $region11: #{tpu_custom_call.1} parent=1 // pred_check_branch
      %17 = sbr.rel (0) target = $region13
    $region12: #{tpu_custom_call.1} parent=1 // pred_region
      %s19 = ssub.s32 256, 256
      %20 = vsyncadd [#allocation5], %s19
      %s21 = sshll.u32 [#allocation4], 4
      %s22 = int_to_ptr.vmem [resolvable:$true] %s21
      %27 = dma.hbm_to_vmem [thread:$0]  %s2, 256, %s22, [#allocation5], 128, 128, 8
    $region13: #{tpu_custom_call.1} parent=1 // pred_fallthru
      _
    // Predicated region
    $region14: #{tpu_custom_call.1} parent=1 // pred_check
      _
    $region15: #{tpu_custom_call.1} parent=1 // pred_check_branch
      %29 = sbr.rel (0) target = $region17
    $region16: #{tpu_custom_call.1} parent=1 // pred_region
      %30 = dma.done [#allocation5], 256
    $region17: #{tpu_custom_call.1} parent=1 // pred_fallthru
      _
    %v31 = vld [vmem:[#allocation4] sm:$0xff]
    %v32 = vld [vmem:[#allocation4 + $0x8] sm:$0xff]
    %vm33 = vcmask 261120
    %v34 = vsel %vm33, %v31, 0.0
    %35 = vadd.xlane.f32.xlu0 %v34
    %v36 = vpop.xlane.xlu0 %35
    %v37 = vsel %vm33, %v32, 0.0
    %38 = vadd.xlane.f32.xlu0 %v37
    %v39 = vpop.xlane.xlu0 %38
    %v40 = vmul.f32 %v31, %v31
    %v41 = vmul.f32 %v32, %v32
    %v42 = vsel %vm33, %v40, 0.0
    %43 = vadd.xlane.f32.xlu0 %v42
    %v44 = vpop.xlane.xlu0 %43
    %v45 = vsel %vm33, %v41, 0.0
    %46 = vadd.xlane.f32.xlu0 %v45
    %v47 = vpop.xlane.xlu0 %46
    %v48 = vmul.f32 %v36, 0.03125
    %v49 = vmul.f32 %v39, 0.03125
    %v50 = vmul.f32 %v48, %v36
    %v51 = vmul.f32 %v49, %v39
    %v52 = vsub.f32 %v44, %v50
    %v53 = vsub.f32 %v47, %v51
    %v54 = vrcp.pop 31.0
    %v55 = vmul.f32 %v52, %v54
    %v56 = vmul.f32 %v53, %v54
    %v57 = vrsqrt.pop %v55
    %v58 = vmul.f32 %v55, %v57
    %vm59 = vcmp.eq.f32.partialorder %v55, inf
    %v60 = vsel %vm59, %v55, %v58
    %vm61 = vcmp.eq.f32.partialorder %v55, 0.0
    %v62 = vand.u32 %v55, 2147483648
    %v63 = vsel %vm61, %v62, %v60
    %v64 = vrsqrt.pop %v56
    %v65 = vmul.f32 %v56, %v64
    %vm66 = vcmp.eq.f32.partialorder %v56, inf
    %v67 = vsel %vm66, %v56, %v65
    %vm68 = vcmp.eq.f32.partialorder %v56, 0.0
    %v69 = vand.u32 %v56, 2147483648
    %v70 = vsel %vm68, %v69, %v67
    %v71 = vadd.f32 %v63, 1e-06
    %v72 = vadd.f32 %v70, 1e-06
    %v73 = vrcp.pop %v71
    %v74 = vrcp.pop %v72
    %v75 = vmul.f32 %v71, %v73
    %v76 = vmul.f32 %v72, %v74
    %v77 = vsub.f32 2.0, %v75
    %v78 = vsub.f32 2.0, %v76
    %v79 = vmul.f32 %v73, %v77
    %v80 = vmul.f32 %v74, %v78
    %s81 = sld [smem:[#allocation2]]
    %s82 = sld [smem:[#allocation3]]
    %v83 = vstv %s81
    %v84 = vmul.f32 %v83, %v79
    %v85 = vmul.f32 %v83, %v80
    %v86 = vmul.f32 %v84, %v48
    %v87 = vmul.f32 %v85, %v49
    %v88 = vstv %s82
    %v89 = vsub.f32 %v88, %v86
    %v90 = vsub.f32 %v88, %v87
    %v91 = vmul.f32 %v31, %v84
    %v92 = vmul.f32 %v32, %v85
    %v93 = vadd.f32 %v91, %v89
    %v94 = vadd.f32 %v92, %v90
    %95 = vst.msk [vmem:[#allocation7] sm:$0xff] %vm33, %v93
    %96 = vst.msk [vmem:[#allocation7 + $0x8] sm:$0xff] %vm33, %v94
    // Predicated region
    $region18: #{tpu_custom_call.1} parent=1 // pred_check
      _
    $region19: #{tpu_custom_call.1} parent=1 // pred_check_branch
      %98 = sbr.rel (0) target = $region21
    $region20: #{tpu_custom_call.1} parent=1 // pred_region
      %s100 = ssub.s32 256, 256
      %101 = vsyncadd [#allocation6], %s100
      %s102 = sshll.u32 [#allocation7], 4
      %s103 = int_to_ptr.vmem [resolvable:$true] %s102
      %108 = dma.vmem_to_hbm [thread:$0]  %s103, 256, %s3, [#allocation6], 128, 128, 8
    $region21: #{tpu_custom_call.1} parent=1 // pred_fallthru
      _
    // Predicated region
    $region22: #{tpu_custom_call.1} parent=1 // pred_check
      _
    $region23: #{tpu_custom_call.1} parent=1 // pred_check_branch
      %110 = sbr.rel (0) target = $region25
    $region24: #{tpu_custom_call.1} parent=1 // pred_region
      %111 = dma.done [#allocation6], 256
    $region25: #{tpu_custom_call.1} parent=1 // pred_fallthru
      _
    %112 = vsyncpa [#allocation5], 1
    %113 = vsyncpa [#allocation6], 1

</llo_original>
